<compile_context>
chip_gen: v7x
topology: tpu7x:2x2x1
jax: 0.10.0
libtpu: 0.0.40
codegen_flags: <defaults>
</compile_context>

<pallas_src>
import functools

import jax
import jax.numpy as jnp
from jax import lax
from jax.experimental import pallas as pl
from jax.experimental.pallas import tpu as pltpu


def _change_similarity_kernel(x1_ref, x2_ref, lbl_ref, out_ref, acc_ref, *,
                              tiles_per_chunk, ts, valid_hw, covered_hw):
    gi = pl.program_id(1)   # pixel-chunk index (parallel)
    ti = pl.program_id(2)   # pixel-tile index within the chunk (arbitrary / reduction)

    @pl.when(ti == 0)
    def _():
        acc_ref[...] = jnp.zeros_like(acc_ref)

    x1 = x1_ref[...].astype(jnp.float32)       # (C, TS, 128) — dense vregs
    x2 = x2_ref[...].astype(jnp.float32)       # (C, TS, 128)
    changed = lbl_ref[...] != 0                # (TS, 128) bool

    # Cosine similarity is scale invariant -> skip the softmax normalisation entirely:
    # cos(softmax(x1), softmax(x2)) == cos(exp(x1 - max1), exp(x2 - max2)).
    e1 = jnp.exp(x1 - jnp.max(x1, axis=0, keepdims=True))
    e2 = jnp.exp(x2 - jnp.max(x2, axis=0, keepdims=True))

    # Axis-0 reductions over the tiny class dim = C-1 elementwise adds of dense (TS,128) arrays.
    dot = jnp.sum(e1 * e2, axis=0)             # (TS, 128)
    s1 = jnp.sum(e1 * e1, axis=0)
    s2 = jnp.sum(e2 * e2, axis=0)
    # ||e|| >= 1 (max element contributes exp(0)=1), so torch's 1e-8 clamp never binds.
    cos = dot * lax.rsqrt(s1 * s2)

    # CosineEmbeddingLoss(margin=0): target=+1 (unchanged) -> 1 - cos ; target=-1 -> max(0, cos)
    loss = jnp.where(changed, jnp.maximum(cos, 0.0), 1.0 - cos)   # (TS, 128)

    if covered_hw > valid_hw:
        # Only tiles at/after the last fully-valid block need the tail mask.
        first_masked = valid_hw // (ts * 128)          # python int
        blk = gi * tiles_per_chunk + ti                # intended (unclamped) row-block index

        @pl.when(blk < first_masked)
        def _():
            acc_ref[...] += loss

        @pl.when(blk >= first_masked)
        def _():
            base = blk * (ts * 128)
            row = lax.broadcasted_iota(jnp.int32, loss.shape, 0)
            lane = lax.broadcasted_iota(jnp.int32, loss.shape, 1)
            pix = base + row * 128 + lane
            acc_ref[...] += jnp.where(pix < valid_hw, loss, 0.0)
    else:
        acc_ref[...] += loss

    @pl.when(ti == pl.num_programs(2) - 1)
    def _():
        out_ref[...] = jnp.sum(acc_ref[...], keepdims=True)   # (1, 1) per-(batch, chunk) partial


def change_similarity_loss(x1, x2, label_change, *, tile_pixels=65536):
    """x1, x2: (b, c, h, w) logits (NCHW, like PyTorch). label_change: (b, h, w), nonzero = changed.

    Matches nn.CosineEmbeddingLoss(margin=0.0, reduction='mean') applied to per-pixel softmax
    distributions, exactly as the PyTorch ChangeSimilarity module does.
    """
    b, c, h, w = x1.shape
    hw = h * w
    n = b * hw

    def round_up(v, m):
        return ((v + m - 1) // m) * m

    # Keep the label stream at 1 B/pixel (cast bool -> int8 only; other int dtypes pass through).
    lbl = label_change.reshape(b, hw)
    if lbl.dtype == jnp.bool_:
        lbl = lbl.astype(jnp.int8)

    # View-style reshapes: NCHW consumed directly, no transpose, no dtype pre-cast.
    x1_r = x1.reshape(b, c, hw)
    x2_r = x2.reshape(b, c, hw)

    hw128 = round_up(hw, 128)
    if hw128 != hw:
        # TODO(synk): this pad copies the inputs once; only hit when h*w % 128 != 0 (<=127 px).
        x1_r = jnp.pad(x1_r, ((0, 0), (0, 0), (0, hw128 - hw)))
        x2_r = jnp.pad(x2_r, ((0, 0), (0, 0), (0, hw128 - hw)))
        lbl = jnp.pad(lbl, ((0, 0), (0, hw128 - hw)))

    rows = hw128 // 128
    # Dense (TS, 128) tiles; TS multiple of 32 (covers int8 label tiling) unless it spans all rows.
    ts = max(32, (tile_pixels // (128 * 32)) * 32)
    if ts >= rows:
        ts = rows
    num_tiles = pl.cdiv(rows, ts)

    # Parallel extent >= 2 even when b == 1 so both v7x TensorCores get work.
    g = 2 if (b == 1 and num_tiles >= 2) else 1
    tpc = pl.cdiv(num_tiles, g)
    last_blk = num_tiles - 1

    x1_4d = x1_r.reshape(b, c, rows, 128)
    x2_4d = x2_r.reshape(b, c, rows, 128)
    lbl_3d = lbl.reshape(b, rows, 128)

    def row_blk(gi, ti):
        # Clamp so an overhanging chunk never indexes past the array; such duplicate tiles
        # are fully zeroed by the in-kernel tail mask (their intended pixel index >= hw).
        return jnp.minimum(gi * tpc + ti, last_blk)

    kernel = functools.partial(
        _change_similarity_kernel,
        tiles_per_chunk=tpc, ts=ts, valid_hw=hw,
        covered_hw=g * tpc * ts * 128)

    partials = pl.pallas_call(
        kernel,
        out_shape=jax.ShapeDtypeStruct((b, g, 1, 1), jnp.float32),
        grid_spec=pltpu.PrefetchScalarGridSpec(
            num_scalar_prefetch=0,
            grid=(b, g, tpc),
            in_specs=[
                pl.BlockSpec((None, c, ts, 128),
                             lambda bi, gi, ti: (bi, 0, row_blk(gi, ti), 0)),
                pl.BlockSpec((None, c, ts, 128),
                             lambda bi, gi, ti: (bi, 0, row_blk(gi, ti), 0)),
                pl.BlockSpec((None, ts, 128),
                             lambda bi, gi, ti: (bi, row_blk(gi, ti), 0)),
            ],
            out_specs=pl.BlockSpec((None, None, 1, 1),
                                   lambda bi, gi, ti: (bi, gi, 0, 0)),
            scratch_shapes=[pltpu.VMEM((ts, 128), jnp.float32)],
        ),
        compiler_params=pltpu.CompilerParams(
            dimension_semantics=("parallel", "parallel", "arbitrary"),
        ),
    )(x1_4d, x2_4d, lbl_3d)

    return jnp.sum(partials) / jnp.float32(n)


def _reference(x1, x2, label_change):
    b, c, h, w = x1.shape
    n = b * h * w
    p1 = jax.nn.softmax(x1.astype(jnp.float32), axis=1)
    p2 = jax.nn.softmax(x2.astype(jnp.float32), axis=1)
    p1 = jnp.transpose(p1, (0, 2, 3, 1)).reshape(n, c)
    p2 = jnp.transpose(p2, (0, 2, 3, 1)).reshape(n, c)
    tgt = (1.0 - 2.0 * label_change.astype(jnp.float32)).reshape(n)
    cos = jnp.sum(p1 * p2, -1) / jnp.maximum(
        jnp.linalg.norm(p1, axis=-1) * jnp.linalg.norm(p2, axis=-1), 1e-8)
    loss = jnp.where(tgt > 0, 1.0 - cos, jnp.maximum(cos, 0.0))
    return jnp.mean(loss)


if __name__ == "__main__":
    key = jax.random.PRNGKey(0)
    k1, k2, k3, k4, k5, k6 = jax.random.split(key, 6)

    # Primary small case (matches the module's typical shapes).
    b, c, h, w = 2, 4, 16, 16
    x1 = jax.random.normal(k1, (b, c, h, w), dtype=jnp.float32)
    x2 = jax.random.normal(k2, (b, c, h, w), dtype=jnp.float32)
    label_change = jax.random.bernoulli(k3, 0.3, (b, h, w))

    loss = jax.block_until_ready(change_similarity_loss(x1, x2, label_change))
    ref = _reference(x1, x2, label_change)
    assert jnp.allclose(loss, ref, atol=1e-5, rtol=1e-5), (loss, ref)

    # Second case exercising b==1 chunk split, multi-tile grid and the tail-mask path.
    b2, c2, h2, w2 = 1, 4, 80, 80
    y1 = jax.random.normal(k4, (b2, c2, h2, w2), dtype=jnp.float32)
    y2 = jax.random.normal(k5, (b2, c2, h2, w2), dtype=jnp.float32)
    lbl2 = jax.random.bernoulli(k6, 0.5, (b2, h2, w2))

    loss2 = jax.block_until_ready(change_similarity_loss(y1, y2, lbl2, tile_pixels=4096))
    ref2 = _reference(y1, y2, lbl2)
    assert jnp.allclose(loss2, ref2, atol=1e-5, rtol=1e-5), (loss2, ref2)

    print("KERNEL_OK")
</pallas_src>

<mosaic_0001>
module attributes {stable_mosaic.version = 11 : i64} {
  func.func @_change_similarity_kernel(%arg0: i32, %arg1: i32, %arg2: i32, %arg3: memref<1x4x2x128xf32, #tpu.memory_space<vmem>>, %arg4: memref<1x4x2x128xf32, #tpu.memory_space<vmem>>, %arg5: memref<1x2x128xi8, #tpu.memory_space<vmem>>, %arg6: memref<1x1x1x1xf32, #tpu.memory_space<vmem>>, %arg7: memref<2x128xf32, #tpu.memory_space<vmem>>) attributes {dimension_semantics = [#tpu.dimension_semantics<parallel>, #tpu.dimension_semantics<parallel>, #tpu.dimension_semantics<arbitrary>], iteration_bounds = array<i64: 2, 1, 1>, scalar_prefetch = 0 : i64, scratch_operands = 1 : i64, tpu.core_type = #tpu.core_type<tc>, window_params = [{transform_indices = @transform_0, window_bounds = array<i64: 1, 4, 2, 128>}, {transform_indices = @transform_1, window_bounds = array<i64: 1, 4, 2, 128>}, {transform_indices = @transform_2, window_bounds = array<i64: 1, 2, 128>}, {transform_indices = @transform_3, window_bounds = array<i64: 1, 1, 1, 1>}]} {
    %c0_i32 = arith.constant 0 : i32
    %0 = arith.cmpi eq, %arg2, %c0_i32 : i32
    %1 = arith.extui %0 : i1 to i32
    %c0_i32_0 = arith.constant 0 : i32
    %2 = arith.cmpi ne, %1, %c0_i32_0 : i32
    scf.if %2 {
      %cst_23 = arith.constant 0.000000e+00 : f32
      %41 = vector.broadcast %cst_23 : f32 to vector<2x128xf32>
      %c0_24 = arith.constant 0 : index
      %c0_25 = arith.constant 0 : index
      %42 = vector.load %arg7[%c0_24, %c0_25] : memref<2x128xf32, #tpu.memory_space<vmem>>, vector<2x128xf32>
      tpu.vector_store %arg7[%c0_24, %c0_25], %41 {strides = array<i32>} : memref<2x128xf32, #tpu.memory_space<vmem>>, vector<2x128xf32>,
    } else {
    }
    %c0 = arith.constant 0 : index
    %c0_1 = arith.constant 0 : index
    %c0_2 = arith.constant 0 : index
    %c0_3 = arith.constant 0 : index
    %3 = vector.load %arg3[%c0, %c0_1, %c0_2, %c0_3] : memref<1x4x2x128xf32, #tpu.memory_space<vmem>>, vector<1x4x2x128xf32>
    %4 = vector.shape_cast %3 : vector<1x4x2x128xf32> to vector<4x2x128xf32>
    %c0_4 = arith.constant 0 : index
    %c0_5 = arith.constant 0 : index
    %c0_6 = arith.constant 0 : index
    %c0_7 = arith.constant 0 : index
    %5 = vector.load %arg4[%c0_4, %c0_5, %c0_6, %c0_7] : memref<1x4x2x128xf32, #tpu.memory_space<vmem>>, vector<1x4x2x128xf32>
    %6 = vector.shape_cast %5 : vector<1x4x2x128xf32> to vector<4x2x128xf32>
    %c0_8 = arith.constant 0 : index
    %c0_9 = arith.constant 0 : index
    %c0_10 = arith.constant 0 : index
    %7 = vector.load %arg5[%c0_8, %c0_9, %c0_10] : memref<1x2x128xi8, #tpu.memory_space<vmem>>, vector<1x2x128xi8>
    %8 = vector.shape_cast %7 : vector<1x2x128xi8> to vector<2x128xi8>
    %c0_i8 = arith.constant 0 : i8
    %9 = vector.broadcast %c0_i8 : i8 to vector<2x128xi8>
    %10 = arith.cmpi ne, %8, %9 : vector<2x128xi8>
    %cst = arith.constant dense<0xFF800000> : vector<2x128xf32>
    %11 = vector.multi_reduction <maximumf>, %4, %cst [0] : vector<4x2x128xf32> to vector<2x128xf32>
    %12 = vector.shape_cast %11 : vector<2x128xf32> to vector<1x2x128xf32>
    %13 = vector.broadcast %12 : vector<1x2x128xf32> to vector<4x2x128xf32>
    %14 = arith.subf %4, %13 : vector<4x2x128xf32>
    %15 = math.exp %14 : vector<4x2x128xf32>
    %cst_11 = arith.constant dense<0xFF800000> : vector<2x128xf32>
    %16 = vector.multi_reduction <maximumf>, %6, %cst_11 [0] : vector<4x2x128xf32> to vector<2x128xf32>
    %17 = vector.shape_cast %16 : vector<2x128xf32> to vector<1x2x128xf32>
    %18 = vector.broadcast %17 : vector<1x2x128xf32> to vector<4x2x128xf32>
    %19 = arith.subf %6, %18 : vector<4x2x128xf32>
    %20 = math.exp %19 : vector<4x2x128xf32>
    %21 = arith.mulf %15, %20 : vector<4x2x128xf32>
    %cst_12 = arith.constant dense<0.000000e+00> : vector<2x128xf32>
    %22 = vector.multi_reduction <add>, %21, %cst_12 [0] : vector<4x2x128xf32> to vector<2x128xf32>
    %23 = arith.mulf %15, %15 : vector<4x2x128xf32>
    %cst_13 = arith.constant dense<0.000000e+00> : vector<2x128xf32>
    %24 = vector.multi_reduction <add>, %23, %cst_13 [0] : vector<4x2x128xf32> to vector<2x128xf32>
    %25 = arith.mulf %20, %20 : vector<4x2x128xf32>
    %cst_14 = arith.constant dense<0.000000e+00> : vector<2x128xf32>
    %26 = vector.multi_reduction <add>, %25, %cst_14 [0] : vector<4x2x128xf32> to vector<2x128xf32>
    %27 = arith.mulf %24, %26 : vector<2x128xf32>
    %28 = math.rsqrt %27 : vector<2x128xf32>
    %29 = arith.mulf %22, %28 : vector<2x128xf32>
    %cst_15 = arith.constant 0.000000e+00 : f32
    %30 = vector.broadcast %cst_15 : f32 to vector<2x128xf32>
    %31 = arith.maximumf %29, %30 : vector<2x128xf32>
    %cst_16 = arith.constant 1.000000e+00 : f32
    %32 = vector.broadcast %cst_16 : f32 to vector<2x128xf32>
    %33 = arith.subf %32, %29 : vector<2x128xf32>
    %34 = arith.select %10, %31, %33 : vector<2x128xi1>, vector<2x128xf32>
    %c0_17 = arith.constant 0 : index
    %c0_18 = arith.constant 0 : index
    %35 = vector.load %arg7[%c0_17, %c0_18] : memref<2x128xf32, #tpu.memory_space<vmem>>, vector<2x128xf32>
    %36 = arith.addf %35, %34 : vector<2x128xf32>
    %c0_19 = arith.constant 0 : index
    %c0_20 = arith.constant 0 : index
    %37 = vector.load %arg7[%c0_19, %c0_20] : memref<2x128xf32, #tpu.memory_space<vmem>>, vector<2x128xf32>
    tpu.vector_store %arg7[%c0_19, %c0_20], %36 {strides = array<i32>} : memref<2x128xf32, #tpu.memory_space<vmem>>, vector<2x128xf32>,
    %c0_i32_21 = arith.constant 0 : i32
    %38 = arith.cmpi eq, %arg2, %c0_i32_21 : i32
    %39 = arith.extui %38 : i1 to i32
    %c0_i32_22 = arith.constant 0 : i32
    %40 = arith.cmpi ne, %39, %c0_i32_22 : i32
    scf.if %40 {
      %c0_23 = arith.constant 0 : index
      %c0_24 = arith.constant 0 : index
      %41 = vector.load %arg7[%c0_23, %c0_24] : memref<2x128xf32, #tpu.memory_space<vmem>>, vector<2x128xf32>
      %42 = vector.shape_cast %41 : vector<2x128xf32> to vector<1x2x128xf32>
      %cst_25 = arith.constant dense<0.000000e+00> : vector<1xf32>
      %43 = vector.multi_reduction <add>, %42, %cst_25 [1, 2] : vector<1x2x128xf32> to vector<1xf32>
      %44 = vector.shape_cast %43 : vector<1xf32> to vector<1x1x1xf32>
      %45 = vector.extract %44[0, 0, 0] : f32 from vector<1x1x1xf32>
      %46 = vector.broadcast %45 : f32 to vector<1x1xf32>
      %c0_26 = arith.constant 0 : index
      %c0_27 = arith.constant 0 : index
      %c0_28 = arith.constant 0 : index
      %c0_29 = arith.constant 0 : index
      %47 = vector.load %arg6[%c0_26, %c0_27, %c0_28, %c0_29] : memref<1x1x1x1xf32, #tpu.memory_space<vmem>>, vector<1x1x1x1xf32>
      %48 = vector.shape_cast %47 : vector<1x1x1x1xf32> to vector<1x1xf32>
      %49 = vector.shape_cast %46 : vector<1x1xf32> to vector<1x1x1x1xf32>
      tpu.vector_store %arg6[%c0_26, %c0_27, %c0_28, %c0_29], %49 {strides = array<i32>} : memref<1x1x1x1xf32, #tpu.memory_space<vmem>>, vector<1x1x1x1xf32>,
    } else {
    }
    return
  }
  func.func @transform_0(%arg0: i32, %arg1: i32, %arg2: i32) -> (i32, i32, i32, i32) {
    %c1_i32 = arith.constant 1 : i32
    %0 = arith.muli %arg1, %c1_i32 : i32
    %1 = arith.addi %0, %arg2 : i32
    %c0_i32 = arith.constant 0 : i32
    %2 = arith.minsi %1, %c0_i32 : i32
    %c0_i32_0 = arith.constant 0 : i32
    %c0_i32_1 = arith.constant 0 : i32
    %c0_i32_2 = arith.constant 0 : i32
    return %arg0, %c0_i32_0, %2, %c0_i32_1 : i32, i32, i32, i32
  }
  func.func @transform_1(%arg0: i32, %arg1: i32, %arg2: i32) -> (i32, i32, i32, i32) {
    %c1_i32 = arith.constant 1 : i32
    %0 = arith.muli %arg1, %c1_i32 : i32
    %1 = arith.addi %0, %arg2 : i32
    %c0_i32 = arith.constant 0 : i32
    %2 = arith.minsi %1, %c0_i32 : i32
    %c0_i32_0 = arith.constant 0 : i32
    %c0_i32_1 = arith.constant 0 : i32
    %c0_i32_2 = arith.constant 0 : i32
    return %arg0, %c0_i32_0, %2, %c0_i32_1 : i32, i32, i32, i32
  }
  func.func @transform_2(%arg0: i32, %arg1: i32, %arg2: i32) -> (i32, i32, i32) {
    %c1_i32 = arith.constant 1 : i32
    %0 = arith.muli %arg1, %c1_i32 : i32
    %1 = arith.addi %0, %arg2 : i32
    %c0_i32 = arith.constant 0 : i32
    %2 = arith.minsi %1, %c0_i32 : i32
    %c0_i32_0 = arith.constant 0 : i32
    %c0_i32_1 = arith.constant 0 : i32
    return %arg0, %2, %c0_i32_0 : i32, i32, i32
  }
  func.func @transform_3(%arg0: i32, %arg1: i32, %arg2: i32) -> (i32, i32, i32, i32) {
    %c0_i32 = arith.constant 0 : i32
    %c0_i32_0 = arith.constant 0 : i32
    %c0_i32_1 = arith.constant 0 : i32
    return %arg0, %arg1, %c0_i32, %c0_i32_0 : i32, i32, i32, i32
  }
}

</mosaic_0001>

<llo_original>
// kernel: tpu_custom_call.1
$region0: #{tpu_custom_call.1}
  #allocation0 [shape = 'u32[]', space=smem, size = 0x4, offset = 0x4, fixed_abs, tag = 'smem constant byte address 0x4 - core index']
  #allocation1 [shape = 'u32[144,128]{1,0:T(1,128)}', space=vmem, size = 0x12000, scoped, tag = 'internal scratch']
  #allocation2 [shape = 'f32[2,128]{1,0:T(2,128)}', space=vmem, size = 0x400, scoped, tag = 'scratch operand']
  %s0 = inlined_call_operand.hbm [shape: f32[2,4,2,128], index: 0, kind: input, shape index: {}]
  %s1 = inlined_call_operand.hbm [shape: f32[2,4,2,128], index: 1, kind: input, shape index: {}]
  %s2 = inlined_call_operand.vmem [shape: s8[2,2,128], index: 2, kind: input, shape index: {}]
  %s3 = inlined_call_operand.vmem [shape: f32[2,1,1,1], index: 3, kind: output, shape index: {}]
  %s4 = sld [smem:[#allocation0]]
  $region61: #{tpu_custom_call.1} parent=0
    _
  %s6 = ssub.s32 1, %s4
  %s7 = scalar_select 0, %s6, %s4
  $region1: #{tpu_custom_call.1} parent=0
    #allocation3 [shape = 'u8[8192]{0}', space=vmem, size = 0x2000, scoped, tag = 'input window, operand 0']
    #allocation4 [shape = 's32[2]{0}', space=sflag, size = 0x8, scoped, tag = 'scoped memory for tpu_custom_call.1']
    #allocation5 [shape = 'u8[8192]{0}', space=vmem, size = 0x2000, scoped, tag = 'input window, operand 1']
    #allocation6 [shape = 's32[2]{0}', space=sflag, size = 0x8, scoped, tag = 'scoped memory for tpu_custom_call.1']
    %8 = vsyncpa [#allocation4], 0
    %s9 = scalar_lea.sflag [#allocation4], 1
    %10 = vsyncpa %s9, 0
    %11 = vsyncpa [#allocation6], 0
    %s12 = scalar_lea.sflag [#allocation6], 1
    %13 = vsyncpa %s12, 0
    loop: start=0, step=1, limit=4
    $region2: #{tpu_custom_call.1} parent=1 // loop_pre_header
      _
    $region3: #{tpu_custom_call.1} parent=1 // loop_header
      %s15 = sphi 0, %s19
      %p16 = scmp.ge.s32.totalorder %s15, 4
      %s22 = sphi 0, %s41
      %s23 = sphi 0, %s37
      %s24 = sphi 0, %s33
      %s25 = sphi 0, %s22
      %s26 = sphi 0, %s23
      %s27 = sphi 0, %s24
      %s28 = sphi 0, %s25
      %s29 = sphi 0, %s26
      %s30 = sphi 0, %s27
      %s52 = sphi 0, %s54
      %s55 = sphi 0, %s52
      %s56 = sphi 0, %s55
      %s72 = sphi 0, %s56
      %s86 = sphi 0, %s88
      %s89 = sphi 0, %s86
      %s90 = sphi 0, %s89
      %s106 = sphi 0, %s90
      %s120 = sphi 0, %s122
      %s123 = sphi 0, %s120
      %s124 = sphi 0, %s123
      %s140 = sphi 0, %s124
      %s148 = sphi 0, %s150
      %s151 = sphi 0, %s148
      %s152 = sphi 0, %s151
      %s168 = sphi 0, %s152
    $region4: #{tpu_custom_call.1} parent=1 // loop_header_branch
      %18 = sbr.rel (%p16) target = $region8
    $region5: #{tpu_custom_call.1} parent=1 // loop_body
      %s20 = ssub.s32 %s15, 1
      %s21 = ssub.s32 %s15, 2
      %s31 = sadd.s32 1, %s24
      %p32 = scmp.ge.s32.totalorder %s31, 1
      %s33 = scalar_select %p32, 0, %s31
      %s34 = sadd.s32 1, %s23
      %s35 = scalar_select %p32, %s34, %s23
      %p36 = scmp.ge.s32.totalorder %s35, 1
      %s37 = scalar_select %p36, 0, %s35
      %s38 = sadd.s32 1, %s22
      %s39 = scalar_select %p36, %s38, %s22
      %p40 = scmp.ge.s32.totalorder %s39, 2
      %s41 = scalar_select %p40, 0, %s39
      %s42 = sadd.s32 %s23, %s24
      %p43 = scmp.lt.s32.totalorder %s42, 0
      %s44 = scalar_select %p43, %s42, 0
      %s45 = sadd.s32 %s37, %s33
      %p46 = scmp.lt.s32.totalorder %s45, 0
      %s47 = scalar_select %p46, %s45, 0
      %s48 = ssub.s32 %s22, %s41
      %s49 = ssub.s32 %s44, %s47
      %s50 = sor.u32 %s48, %s49
      %p51 = scmp.eq.s32.totalorder %s50, 0
      %s53 = sadd.s32 %s52, 1
      %s54 = scalar_select %p51, %s52, %s53
      %p57 = pneg %p51
      %p58 = scmp.eq.s32.totalorder %s15, 1
      %p59 = por %p57, %p58
      %p60 = scmp.ne.s32.totalorder %s52, %s55
      %p61 = scmp.eq.s32.totalorder %s15, 0
      %p62 = por %p60, %p61
      %p63 = scmp.ne.s32.totalorder %s52, %s55
      %p64 = scmp.eq.s32.totalorder %s20, 1
      %p65 = por %p63, %p64
      %p66 = scmp.ne.s32.totalorder %s55, %s56
      %p67 = scmp.eq.s32.totalorder %s20, 0
      %p68 = por %p66, %p67
      %p69 = scmp.ne.s32.totalorder %s55, %s56
      %p70 = scmp.eq.s32.totalorder %s21, 1
      %p71 = por %p69, %p70
      %p73 = scmp.ne.s32.totalorder %s56, %s72
      %p74 = scmp.eq.s32.totalorder %s21, 0
      %p75 = por %p73, %p74
      %s76 = sadd.s32 %s23, %s24
      %p77 = scmp.lt.s32.totalorder %s76, 0
      %s78 = scalar_select %p77, %s76, 0
      %s79 = sadd.s32 %s37, %s33
      %p80 = scmp.lt.s32.totalorder %s79, 0
      %s81 = scalar_select %p80, %s79, 0
      %s82 = ssub.s32 %s22, %s41
      %s83 = ssub.s32 %s78, %s81
      %s84 = sor.u32 %s82, %s83
      %p85 = scmp.eq.s32.totalorder %s84, 0
      %s87 = sadd.s32 %s86, 1
      %s88 = scalar_select %p85, %s86, %s87
      %p91 = pneg %p85
      %p92 = scmp.eq.s32.totalorder %s15, 1
      %p93 = por %p91, %p92
      %p94 = scmp.ne.s32.totalorder %s86, %s89
      %p95 = scmp.eq.s32.totalorder %s15, 0
      %p96 = por %p94, %p95
      %p97 = scmp.ne.s32.totalorder %s86, %s89
      %p98 = scmp.eq.s32.totalorder %s20, 1
      %p99 = por %p97, %p98
      %p100 = scmp.ne.s32.totalorder %s89, %s90
      %p101 = scmp.eq.s32.totalorder %s20, 0
      %p102 = por %p100, %p101
      %p103 = scmp.ne.s32.totalorder %s89, %s90
      %p104 = scmp.eq.s32.totalorder %s21, 1
      %p105 = por %p103, %p104
      %p107 = scmp.ne.s32.totalorder %s90, %s106
      %p108 = scmp.eq.s32.totalorder %s21, 0
      %p109 = por %p107, %p108
      %s110 = sadd.s32 %s23, %s24
      %p111 = scmp.lt.s32.totalorder %s110, 0
      %s112 = scalar_select %p111, %s110, 0
      %s113 = sadd.s32 %s37, %s33
      %p114 = scmp.lt.s32.totalorder %s113, 0
      %s115 = scalar_select %p114, %s113, 0
      %s116 = ssub.s32 %s22, %s41
      %s117 = ssub.s32 %s112, %s115
      %s118 = sor.u32 %s116, %s117
      %p119 = scmp.eq.s32.totalorder %s118, 0
      %s121 = sadd.s32 %s120, 1
      %s122 = scalar_select %p119, %s120, %s121
      %p125 = pneg %p119
      %p126 = scmp.eq.s32.totalorder %s15, 1
      %p127 = por %p125, %p126
      %p128 = scmp.ne.s32.totalorder %s120, %s123
      %p129 = scmp.eq.s32.totalorder %s15, 0
      %p130 = por %p128, %p129
      %p131 = scmp.ne.s32.totalorder %s120, %s123
      %p132 = scmp.eq.s32.totalorder %s20, 1
      %p133 = por %p131, %p132
      %p134 = scmp.ne.s32.totalorder %s123, %s124
      %p135 = scmp.eq.s32.totalorder %s20, 0
      %p136 = por %p134, %p135
      %p137 = scmp.ne.s32.totalorder %s123, %s124
      %p138 = scmp.eq.s32.totalorder %s21, 1
      %p139 = por %p137, %p138
      %p141 = scmp.ne.s32.totalorder %s124, %s140
      %p142 = scmp.eq.s32.totalorder %s21, 0
      %p143 = por %p141, %p142
      %s144 = ssub.s32 %s22, %s41
      %s145 = ssub.s32 %s23, %s37
      %s146 = sor.u32 %s144, %s145
      %p147 = scmp.eq.s32.totalorder %s146, 0
      %s149 = sadd.s32 %s148, 1
      %s150 = scalar_select %p147, %s148, %s149
      %p153 = pneg %p147
      %p154 = scmp.eq.s32.totalorder %s15, 1
      %p155 = por %p153, %p154
      %p156 = scmp.ne.s32.totalorder %s148, %s151
      %p157 = scmp.eq.s32.totalorder %s15, 0
      %p158 = por %p156, %p157
      %p159 = scmp.ne.s32.totalorder %s148, %s151
      %p160 = scmp.eq.s32.totalorder %s20, 1
      %p161 = por %p159, %p160
      %p162 = scmp.ne.s32.totalorder %s151, %s152
      %p163 = scmp.eq.s32.totalorder %s20, 0
      %p164 = por %p162, %p163
      %p165 = scmp.ne.s32.totalorder %s151, %s152
      %p166 = scmp.eq.s32.totalorder %s21, 1
      %p167 = por %p165, %p166
      %p169 = scmp.ne.s32.totalorder %s152, %s168
      %p170 = scmp.eq.s32.totalorder %s21, 0
      %p171 = por %p169, %p170
      %p172 = scmp.le.s32.totalorder 1, %s15
      %p173 = scmp.lt.s32.totalorder %s15, 3
      %p174 = pnand %p172, %p173
      %p175 = pneg %p174
      // Predicated region
      $region9: #{tpu_custom_call.1} parent=5 // pred_check
        _
      $region10: #{tpu_custom_call.1} parent=5 // pred_check_branch
        %177 = sbr.rel (%p174) target = $region12
      $region11: #{tpu_custom_call.1} parent=5 // pred_region
        %s178 = ssub.s32 %s15, 1
      $region12: #{tpu_custom_call.1} parent=5 // pred_fallthru
        _
      %p179 = scmp.lt.s32.totalorder %s15, 2
      // Predicated region
      $region13: #{tpu_custom_call.1} parent=5 // pred_check
        %p180 = pneg %p179
      $region14: #{tpu_custom_call.1} parent=5 // pred_check_branch
        %182 = sbr.rel (%p180) target = $region16
      $region15: #{tpu_custom_call.1} parent=5 // pred_region
        // Predicated region
        $region17: #{tpu_custom_call.1} parent=15 // pred_check
          %p183 = pneg %p62
        $region18: #{tpu_custom_call.1} parent=15 // pred_check_branch
          %185 = sbr.rel (%p183) target = $region20
        $region19: #{tpu_custom_call.1} parent=15 // pred_region
          %s186 = sand.u32 %s52, 1
          %s187 = scalar_lea.sflag [#allocation4], %s186
          %s188 = sand.u32 %s52, 1
          %s189 = smul.addr %s188, 8
          %s190 = scalar_lea.vmem [#allocation3], %s189
          %s191 = sadd.s32 %s23, %s24
          %p192 = scmp.lt.s32.totalorder %s191, 0
          %s193 = scalar_select %p192, %s191, 0
          %s195 = ssub.s32 128, 128
          %196 = vsyncadd %s187, %s195
          %s197 = smul.addr %s22, 4
          %s198 = sadd.s32 %s193, %s197
          %s199 = smul.addr %s198, 32
          %s200 = scalar_lea.hbm %s0, %s199
          %s201 = sshll.u32 %s190, 4
          %s202 = int_to_ptr.vmem [resolvable:$true] %s201
          %207 = dma.hbm_to_vmem [thread:$0]  %s200, 128, %s202, %s187, 32, 32, 2
        $region20: #{tpu_custom_call.1} parent=15 // pred_fallthru
          _
        // Predicated region
        $region21: #{tpu_custom_call.1} parent=15 // pred_check
          %p208 = pneg %p96
        $region22: #{tpu_custom_call.1} parent=15 // pred_check_branch
          %210 = sbr.rel (%p208) target = $region24
        $region23: #{tpu_custom_call.1} parent=15 // pred_region
          %s211 = sand.u32 %s86, 1
          %s212 = scalar_lea.sflag [#allocation6], %s211
          %s213 = sand.u32 %s86, 1
          %s214 = smul.addr %s213, 8
          %s215 = scalar_lea.vmem [#allocation5], %s214
          %s216 = sadd.s32 %s23, %s24
          %p217 = scmp.lt.s32.totalorder %s216, 0
          %s218 = scalar_select %p217, %s216, 0
          %s220 = ssub.s32 128, 128
          %221 = vsyncadd %s212, %s220
          %s222 = smul.addr %s22, 4
          %s223 = sadd.s32 %s218, %s222
          %s224 = smul.addr %s223, 32
          %s225 = scalar_lea.hbm %s1, %s224
          %s226 = sshll.u32 %s215, 4
          %s227 = int_to_ptr.vmem [resolvable:$true] %s226
          %232 = dma.hbm_to_vmem [thread:$0]  %s225, 128, %s227, %s212, 32, 32, 2
        $region24: #{tpu_custom_call.1} parent=15 // pred_fallthru
          _
        // Predicated region
        $region25: #{tpu_custom_call.1} parent=15 // pred_check
          %p233 = pneg %p130
        $region26: #{tpu_custom_call.1} parent=15 // pred_check_branch
          %235 = sbr.rel (%p233) target = $region28
        $region27: #{tpu_custom_call.1} parent=15 // pred_region
          %s236 = sadd.s32 %s23, %s24
          %p237 = scmp.lt.s32.totalorder %s236, 0
          %s238 = scalar_select %p237, %s236, 0
          %p239 = scmp.lt.s32.totalorder %s22, 1
          %s240 = scalar_select %p239, %s22, 1
          %p241 = scmp.lt.s32.totalorder %s238, 0
          %s242 = scalar_select %p241, %s238, 0
          %s243 = sadd.s32 %s242, %s240
          %s244 = scalar_lea.vmem %s2, %s243
          %s245 = sadd.s32 %s23, %s24
          %p246 = scmp.lt.s32.totalorder %s245, 0
          %s247 = scalar_select %p246, %s245, 0
        $region28: #{tpu_custom_call.1} parent=15 // pred_fallthru
          _
      $region16: #{tpu_custom_call.1} parent=5 // pred_fallthru
        _
      %p248 = scmp.le.s32.totalorder 1, %s15
      %p249 = scmp.lt.s32.totalorder %s15, 3
      %p250 = pnand %p248, %p249
      %p251 = pneg %p250
      // Predicated region
      $region29: #{tpu_custom_call.1} parent=5 // pred_check
        _
      $region30: #{tpu_custom_call.1} parent=5 // pred_check_branch
        %253 = sbr.rel (%p250) target = $region32
      $region31: #{tpu_custom_call.1} parent=5 // pred_region
        %s254 = ssub.s32 %s15, 1
        %s255 = sand.u32 %s55, 1
        %s256 = scalar_lea.sflag [#allocation4], %s255
        %s257 = sand.u32 %s55, 1
        %s258 = smul.addr %s257, 8
        %s259 = scalar_lea.vmem [#allocation3], %s258
        // Predicated region
        $region33: #{tpu_custom_call.1} parent=31 // pred_check
          %p260 = pneg %p68
        $region34: #{tpu_custom_call.1} parent=31 // pred_check_branch
          %262 = sbr.rel (%p260) target = $region36
        $region35: #{tpu_custom_call.1} parent=31 // pred_region
          %263 = dma.done %s256, 128
        $region36: #{tpu_custom_call.1} parent=31 // pred_fallthru
          _
        %s264 = sand.u32 %s89, 1
        %s265 = scalar_lea.sflag [#allocation6], %s264
        %s266 = sand.u32 %s89, 1
        %s267 = smul.addr %s266, 8
        %s268 = scalar_lea.vmem [#allocation5], %s267
        // Predicated region
        $region37: #{tpu_custom_call.1} parent=31 // pred_check
          %p269 = pneg %p102
        $region38: #{tpu_custom_call.1} parent=31 // pred_check_branch
          %271 = sbr.rel (%p269) target = $region40
        $region39: #{tpu_custom_call.1} parent=31 // pred_region
          %272 = dma.done %s265, 128
        $region40: #{tpu_custom_call.1} parent=31 // pred_fallthru
          _
        %s273 = sand.u32 %s55, 1
        %s274 = scalar_lea.sflag [#allocation4], %s273
        %s275 = sand.u32 %s55, 1
        %s276 = smul.addr %s275, 8
        %s277 = scalar_lea.vmem [#allocation3], %s276
        %p278 = pneg %p68
        %p279 = pneg %p65
        %s280 = sand.u32 %s89, 1
        %s281 = scalar_lea.sflag [#allocation6], %s280
        %s282 = sand.u32 %s89, 1
        %s283 = smul.addr %s282, 8
        %s284 = scalar_lea.vmem [#allocation5], %s283
        %p285 = pneg %p102
        %p286 = pneg %p99
        %s287 = sadd.s32 %s26, %s27
        %p288 = scmp.lt.s32.totalorder %s287, 0
        %s289 = scalar_select %p288, %s287, 0
        %p290 = scmp.lt.s32.totalorder %s25, 1
        %s291 = scalar_select %p290, %s25, 1
        %p292 = scmp.lt.s32.totalorder %s289, 0
        %s293 = scalar_select %p292, %s289, 0
        %s294 = sadd.s32 %s293, %s291
        %s295 = scalar_lea.vmem %s2, %s294
        %p296 = pneg %p136
        %p297 = pneg %p133
        %p298 = pneg %p164
        %p299 = pneg %p161
        %p300 = scmp.lt.s32.totalorder %s25, 1
        %s301 = scalar_select %p300, %s25, 1
        %p302 = scmp.lt.s32.totalorder %s26, 0
        %s303 = scalar_select %p302, %s26, 0
        %s304 = sadd.s32 %s303, %s301
        %s305 = scalar_lea.vmem %s3, %s304
        %s306 = sadd.s32 %s26, %s27
        %p307 = scmp.lt.s32.totalorder %s306, 0
        %s308 = scalar_select %p307, %s306, 0
        %s309 = sadd.s32 %s26, %s27
        %p310 = scmp.lt.s32.totalorder %s309, 0
        %s311 = scalar_select %p310, %s309, 0
        %s312 = sadd.s32 %s26, %s27
        %p313 = scmp.lt.s32.totalorder %s312, 0
        %s314 = scalar_select %p313, %s312, 0
        %p315 = scmp.lt.s32.totalorder %s25, 1
        %s316 = scalar_select %p315, %s25, 1
        %p317 = scmp.lt.s32.totalorder %s314, 0
        %s318 = scalar_select %p317, %s314, 0
        %s319 = sadd.s32 %s318, %s316
        %s320 = scalar_lea.vmem %s2, %s319
        %s321 = sadd.s32 %s26, %s27
        %p322 = scmp.lt.s32.totalorder %s321, 0
        %s323 = scalar_select %p322, %s321, 0
        %p324 = scmp.lt.s32.totalorder %s25, 1
        %s325 = scalar_select %p324, %s25, 1
        %p326 = scmp.lt.s32.totalorder %s26, 0
        %s327 = scalar_select %p326, %s26, 0
        %s328 = sadd.s32 %s327, %s325
        %s329 = scalar_lea.vmem %s3, %s328
        %p332 = scmp.eq.s32.totalorder %s27, 0
        // Predicated region
        $region41: #{tpu_custom_call.1} parent=31 // pred_check
          %p333 = pneg %p332
        $region42: #{tpu_custom_call.1} parent=31 // pred_check_branch
          %335 = sbr.rel (%p333) target = $region44
        $region43: #{tpu_custom_call.1} parent=31 // pred_region
          %336 = vst [vmem:[#allocation2] sm:$0x3] 0.0
        $region44: #{tpu_custom_call.1} parent=31 // pred_fallthru
          _
        %v337 = vld [vmem:[%s259] sm:$0x3]
        %v338 = vld [vmem:[%s259 + $0x2] sm:$0x3]
        %v339 = vld [vmem:[%s259 + $0x4] sm:$0x3]
        %v340 = vld [vmem:[%s259 + $0x6] sm:$0x3]
        %v341 = vld [vmem:[%s268] sm:$0x3]
        %v342 = vld [vmem:[%s268 + $0x2] sm:$0x3]
        %v343 = vld [vmem:[%s268 + $0x4] sm:$0x3]
        %v344 = vld [vmem:[%s268 + $0x6] sm:$0x3]
        %v345 = vld [vmem:[%s320] sm:$0x1]
        %vm346 = vnez %v345
        %vm347 = vcmask 1041408
        %v348 = vsel %vm347, %v337, -inf
        %v349 = vsel %vm347, %v338, -inf
        %v350 = vsel %vm347, %v339, -inf
        %v351 = vsel %vm347, %v340, -inf
        %v352 = vmax.f32 %v348, %v349
        %v353 = vmax.f32 %v350, %v351
        %v354 = vmax.f32 %v352, %v353
        %v355 = vsub.f32 %v337, %v354
        %v356 = vsub.f32 %v338, %v354
        %v357 = vsub.f32 %v339, %v354
        %v358 = vsub.f32 %v340, %v354
        %v359 = vmul.f32 %v355, 1.442695
        %v360 = vpow.pop %v359
        %v361 = vmul.f32 %v356, 1.442695
        %v362 = vpow.pop %v361
        %v363 = vmul.f32 %v357, 1.442695
        %v364 = vpow.pop %v363
        %v365 = vmul.f32 %v358, 1.442695
        %v366 = vpow.pop %v365
        %v367 = vsel %vm347, %v341, -inf
        %v368 = vsel %vm347, %v342, -inf
        %v369 = vsel %vm347, %v343, -inf
        %v370 = vsel %vm347, %v344, -inf
        %v371 = vmax.f32 %v367, %v368
        %v372 = vmax.f32 %v369, %v370
        %v373 = vmax.f32 %v371, %v372
        %v374 = vsub.f32 %v341, %v373
        %v375 = vsub.f32 %v342, %v373
        %v376 = vsub.f32 %v343, %v373
        %v377 = vsub.f32 %v344, %v373
        %v378 = vmul.f32 %v374, 1.442695
        %v379 = vpow.pop %v378
        %v380 = vmul.f32 %v375, 1.442695
        %v381 = vpow.pop %v380
        %v382 = vmul.f32 %v376, 1.442695
        %v383 = vpow.pop %v382
        %v384 = vmul.f32 %v377, 1.442695
        %v385 = vpow.pop %v384
        %v386 = vmul.f32 %v360, %v379
        %v387 = vmul.f32 %v362, %v381
        %v388 = vmul.f32 %v364, %v383
        %v389 = vmul.f32 %v366, %v385
        %v390 = vsel %vm347, %v386, 0.0
        %v391 = vsel %vm347, %v387, 0.0
        %v392 = vadd.f32 %v390, %v391
        %v393 = vsel %vm347, %v388, 0.0
        %v394 = vadd.f32 %v392, %v393
        %v395 = vsel %vm347, %v389, 0.0
        %v396 = vadd.f32 %v394, %v395
        %v397 = vmul.f32 %v360, %v360
        %v398 = vmul.f32 %v362, %v362
        %v399 = vmul.f32 %v364, %v364
        %v400 = vmul.f32 %v366, %v366
        %v401 = vsel %vm347, %v397, 0.0
        %v402 = vsel %vm347, %v398, 0.0
        %v403 = vadd.f32 %v401, %v402
        %v404 = vsel %vm347, %v399, 0.0
        %v405 = vadd.f32 %v403, %v404
        %v406 = vsel %vm347, %v400, 0.0
        %v407 = vadd.f32 %v405, %v406
        %v408 = vmul.f32 %v379, %v379
        %v409 = vmul.f32 %v381, %v381
        %v410 = vmul.f32 %v383, %v383
        %v411 = vmul.f32 %v385, %v385
        %v412 = vsel %vm347, %v408, 0.0
        %v413 = vsel %vm347, %v409, 0.0
        %v414 = vadd.f32 %v412, %v413
        %v415 = vsel %vm347, %v410, 0.0
        %v416 = vadd.f32 %v414, %v415
        %v417 = vsel %vm347, %v411, 0.0
        %v418 = vadd.f32 %v416, %v417
        %v419 = vmul.f32 %v407, %v418
        %v420 = vrsqrt.pop %v419
        %v421 = vmul.f32 %v396, %v420
        %v422 = vmax.f32 %v421, 0.0
        %v423 = vsub.f32 1.0, %v421
        %v424 = vsel %vm346, 16843009, 0
        %v425 = vunpack.c.0.s8 %v424
        %vm426 = vcmp.ne.s32.totalorder %v425, 0
        %v427 = vsel %vm426, %v422, %v423
        %v428 = vld [vmem:[#allocation2] sm:$0x3]
        %v429 = vadd.f32 %v428, %v427
        %430 = vst [vmem:[#allocation2] sm:$0x3] %v429
        // Predicated region
        $region45: #{tpu_custom_call.1} parent=31 // pred_check
          %p431 = pneg %p332
        $region46: #{tpu_custom_call.1} parent=31 // pred_check_branch
          %433 = sbr.rel (%p431) target = $region48
        $region47: #{tpu_custom_call.1} parent=31 // pred_region
          %v434 = vld [vmem:[#allocation2] sm:$0x3]
          %v435 = vsel %vm347, %v434, 0.0
          %436 = vadd.xlane.f32.xlu0 %v435
          %v437 = vpop.xlane.xlu0 %436
          %v438 = vrot.slane %v437, 4
          %v439 = vadd.f32 %v437, %v438
          %v440 = vrot.slane %v439, 2
          %v441 = vadd.f32 %v439, %v440
          %v442 = vrot.slane %v441, 1
          %v443 = vadd.f32 %v441, %v442
          %s444 = vtos %v443
          %v445 = vstv %s444
          %vm446 = vcmask 0
          %447 = vst.msk [vmem:[%s329] sm:$0x1] %vm446, %v445
        $region48: #{tpu_custom_call.1} parent=31 // pred_fallthru
          _
        %p448 = scmp.lt.s32.totalorder %s25, 1
        %s449 = scalar_select %p448, %s25, 1
        %p450 = scmp.lt.s32.totalorder %s26, 0
        %s451 = scalar_select %p450, %s26, 0
        %s452 = sadd.s32 %s451, %s449
        %s453 = scalar_lea.vmem %s3, %s452
        // Predicated region
        $region49: #{tpu_custom_call.1} parent=31 // pred_check
          %p454 = pneg %p161
        $region50: #{tpu_custom_call.1} parent=31 // pred_check_branch
          %456 = sbr.rel (%p454) target = $region52
        $region51: #{tpu_custom_call.1} parent=31 // pred_region
          _
        $region52: #{tpu_custom_call.1} parent=31 // pred_fallthru
          _
      $region32: #{tpu_custom_call.1} parent=5 // pred_fallthru
        _
      %p457 = scmp.le.s32.totalorder 2, %s15
      // Predicated region
      $region53: #{tpu_custom_call.1} parent=5 // pred_check
        %p458 = pneg %p457
      $region54: #{tpu_custom_call.1} parent=5 // pred_check_branch
        %460 = sbr.rel (%p458) target = $region56
      $region55: #{tpu_custom_call.1} parent=5 // pred_region
        %s461 = ssub.s32 %s15, 2
        // Predicated region
        $region57: #{tpu_custom_call.1} parent=55 // pred_check
          %p462 = pneg %p167
        $region58: #{tpu_custom_call.1} parent=55 // pred_check_branch
          %464 = sbr.rel (%p462) target = $region60
        $region59: #{tpu_custom_call.1} parent=55 // pred_region
          %p465 = scmp.lt.s32.totalorder %s28, 1
          %s466 = scalar_select %p465, %s28, 1
          %p467 = scmp.lt.s32.totalorder %s29, 0
          %s468 = scalar_select %p467, %s29, 0
          %s469 = sadd.s32 %s468, %s466
          %s470 = scalar_lea.vmem %s3, %s469
        $region60: #{tpu_custom_call.1} parent=55 // pred_fallthru
          _
      $region56: #{tpu_custom_call.1} parent=5 // pred_fallthru
        _
    $region6: #{tpu_custom_call.1} parent=1 // loop_footer
      %s19 = sadd.s32 1, %s15
    $region7: #{tpu_custom_call.1} parent=1 // loop_footer_branch
      %14 = sbr.rel target = $region3
    $region8: #{tpu_custom_call.1} parent=1 // loop_exit
      _
    %471 = vsyncpa [#allocation4], 1
    %s472 = scalar_lea.sflag [#allocation4], 1
    %473 = vsyncpa %s472, 1
    %474 = vsyncpa [#allocation6], 1
    %s475 = scalar_lea.sflag [#allocation6], 1
    %476 = vsyncpa %s475, 1

</llo_original>
